<compile_context>
chip_gen: v7x
topology: tpu7x:2x2x1
jax: 0.10.0
libtpu: 0.0.40
codegen_flags: <defaults>
</compile_context>

<pallas_src>
import functools

import jax
import jax.numpy as jnp
from jax.experimental import pallas as pl
from jax.experimental.pallas import tpu as pltpu

INPUT_DIM = 1
OUTPUT_DIM = 1
LANES = 128            # vreg lane width
SUBLANES = 8           # vreg sublane width (f32)
TILE_ROWS = 4096       # rows per block: 4096*128*4B = 2 MiB per buffer
SMALL_ROWS = 64        # <= 8192 elements: pure-XLA fast path


def _round_up(a, m):
    return -(-a // m) * m


def linear_kernel(w_ref, b_ref, x_ref, o_ref):
    # Scalars from SMEM broadcast straight into the VPU fma; the tile is a
    # single lane-dense elementwise pass (HBM-bandwidth bound).
    o_ref[...] = x_ref[...] * w_ref[0] + b_ref[0]


def linear_forward(x, weight, bias, *, tile_rows=TILE_ROWS,
                   min_pallas_rows=SMALL_ROWS):
    """x: (B, 1) f32; weight: (out, in) = (1, 1) f32 (PyTorch layout); bias: (1,)."""
    B, Din = x.shape
    assert Din == INPUT_DIM
    assert weight.shape == (OUTPUT_DIM, INPUT_DIM)
    assert bias.shape == (OUTPUT_DIM,)

    n = B * Din
    rows = -(-n // LANES)                      # ceil(B / 128)
    rows_p = _round_up(max(rows, 1), SUBLANES) # sublane-aligned row count

    # Small-batch fast path: launch/pad/slice fixed costs exceed the data
    # movement; a fused XLA elementwise op is strictly faster here.
    if rows_p <= min_pallas_rows:
        return x * weight[0, 0] + bias[0]

    # Lane-dense layout: flatten the batch onto the 128-lane axis.  Pad only
    # to an (8, 128) tile multiple (<= 1023 elements), NOT to a tile_rows
    # multiple; the partial last grid block is masked by Pallas.
    flat = x.reshape(-1)
    padded = rows_p * LANES
    if padded != n:
        flat = jnp.pad(flat, (0, padded - n))
    x2d = flat.reshape(rows_p, LANES)

    # Tile selection: big tiles to amortize per-step overhead, but keep the
    # grid at >= 2 steps so the parallel axis can shard across 2 TensorCores.
    tr = min(tile_rows, rows_p)
    if rows_p >= 2 * SUBLANES and tr == rows_p:
        tr = _round_up(-(-rows_p // 2), SUBLANES)
    grid = (-(-rows_p // tr),)

    w_s = weight.reshape(1)                    # true scalar -> SMEM
    b_s = bias.reshape(1)                      # true scalar -> SMEM

    out2d = pl.pallas_call(
        linear_kernel,
        out_shape=jax.ShapeDtypeStruct((rows_p, LANES), x.dtype),
        grid_spec=pltpu.PrefetchScalarGridSpec(
            num_scalar_prefetch=0,
            grid=grid,
            in_specs=[
                pl.BlockSpec(memory_space=pltpu.MemorySpace.SMEM),   # weight scalar
                pl.BlockSpec(memory_space=pltpu.MemorySpace.SMEM),   # bias scalar
                pl.BlockSpec((tr, LANES), lambda i: (i, 0)),         # x tile
            ],
            out_specs=pl.BlockSpec((tr, LANES), lambda i: (i, 0)),
        ),
        compiler_params=pltpu.CompilerParams(
            dimension_semantics=("parallel",),
        ),
    )(w_s, b_s, x2d)

    # Drop padding and restore the (B, out_features) shape PyTorch returns.
    return out2d.reshape(-1)[:n].reshape(B, OUTPUT_DIM)


# Jitted entry point (static tiling knobs; shapes are static under trace).
linear_forward_jit = jax.jit(
    linear_forward, static_argnames=("tile_rows", "min_pallas_rows"))


def _reference(x, weight, bias):
    return x @ weight.T + bias[None, :]


if __name__ == "__main__":
    key = jax.random.PRNGKey(0)
    kx, kw, kb, kx2, kx3 = jax.random.split(key, 5)

    # Deterministic parameter init (mimics nn.Linear uniform(-1/sqrt(in), 1/sqrt(in))).
    bound = 1.0 / (INPUT_DIM ** 0.5)
    weight = jax.random.uniform(
        kw, (OUTPUT_DIM, INPUT_DIM), dtype=jnp.float32, minval=-bound, maxval=bound
    )
    bias = jax.random.uniform(
        kb, (OUTPUT_DIM,), dtype=jnp.float32, minval=-bound, maxval=bound
    )

    # Small batch (as the module implies): 8 samples, 1 feature.  Force the
    # Pallas path (min_pallas_rows=0) so the kernel itself is exercised.
    B = 8
    x = jax.random.normal(kx, (B, INPUT_DIM), dtype=jnp.float32)
    y = linear_forward_jit(x, weight, bias, min_pallas_rows=0)
    jax.block_until_ready(y)
    assert y.shape == (B, OUTPUT_DIM)
    assert jnp.allclose(y, _reference(x, weight, bias), atol=1e-5), "mismatch B=8"

    # Non-multiple-of-128 batch: exercises lane padding + tail slice (Pallas path).
    B2 = 300
    x2 = jax.random.normal(kx2, (B2, INPUT_DIM), dtype=jnp.float32)
    y2 = linear_forward_jit(x2, weight, bias, min_pallas_rows=0)
    jax.block_until_ready(y2)
    assert y2.shape == (B2, OUTPUT_DIM)
    assert jnp.allclose(y2, _reference(x2, weight, bias), atol=1e-5), "mismatch B=300"

    # Same small batch through the default auto path (XLA fast path for tiny B).
    y2_fast = linear_forward_jit(x2, weight, bias)
    jax.block_until_ready(y2_fast)
    assert jnp.allclose(y2_fast, _reference(x2, weight, bias), atol=1e-5), "mismatch fast path"

    # Moderate batch: multi-step parallel grid with a masked partial last block.
    B3 = 8197
    x3 = jax.random.normal(kx3, (B3, INPUT_DIM), dtype=jnp.float32)
    y3 = linear_forward_jit(x3, weight, bias)
    jax.block_until_ready(y3)
    assert y3.shape == (B3, OUTPUT_DIM)
    assert jnp.allclose(y3, _reference(x3, weight, bias), atol=1e-5), "mismatch B=8197"

    print("KERNEL_OK")
</pallas_src>

<mosaic_0001>
module attributes {stable_mosaic.version = 11 : i64} {
  func.func @linear_kernel(%arg0: i32, %arg1: memref<1xf32, #tpu.memory_space<smem>>, %arg2: memref<1xf32, #tpu.memory_space<smem>>, %arg3: memref<8x128xf32, #tpu.memory_space<vmem>>, %arg4: memref<8x128xf32, #tpu.memory_space<vmem>>) attributes {dimension_semantics = [#tpu.dimension_semantics<parallel>], iteration_bounds = array<i64: 1>, scalar_prefetch = 0 : i64, scratch_operands = 0 : i64, tpu.core_type = #tpu.core_type<tc>, window_params = [{transform_indices = @transform_0, window_bounds = array<i64: 1>}, {transform_indices = @transform_1, window_bounds = array<i64: 1>}, {transform_indices = @transform_2, window_bounds = array<i64: 8, 128>}, {transform_indices = @transform_3, window_bounds = array<i64: 8, 128>}]} {
    %c0 = arith.constant 0 : index
    %c0_0 = arith.constant 0 : index
    %0 = vector.load %arg3[%c0, %c0_0] : memref<8x128xf32, #tpu.memory_space<vmem>>, vector<8x128xf32>
    %c0_1 = arith.constant 0 : index
    %1 = memref.load %arg1[%c0_1] : memref<1xf32, #tpu.memory_space<smem>>
    %2 = vector.broadcast %1 : f32 to vector<8x128xf32>
    %3 = arith.mulf %0, %2 : vector<8x128xf32>
    %c0_2 = arith.constant 0 : index
    %4 = memref.load %arg2[%c0_2] : memref<1xf32, #tpu.memory_space<smem>>
    %5 = vector.broadcast %4 : f32 to vector<8x128xf32>
    %6 = arith.addf %3, %5 : vector<8x128xf32>
    %c0_3 = arith.constant 0 : index
    %c0_4 = arith.constant 0 : index
    %7 = vector.load %arg4[%c0_3, %c0_4] : memref<8x128xf32, #tpu.memory_space<vmem>>, vector<8x128xf32>
    tpu.vector_store %arg4[%c0_3, %c0_4], %6 {strides = array<i32>} : memref<8x128xf32, #tpu.memory_space<vmem>>, vector<8x128xf32>,
    return
  }
  func.func @transform_0(%arg0: i32) -> i32 {
    %c0_i32 = arith.constant 0 : i32
    %c0_i32_0 = arith.constant 0 : i32
    return %c0_i32 : i32
  }
  func.func @transform_1(%arg0: i32) -> i32 {
    %c0_i32 = arith.constant 0 : i32
    %c0_i32_0 = arith.constant 0 : i32
    return %c0_i32 : i32
  }
  func.func @transform_2(%arg0: i32) -> (i32, i32) {
    %c0_i32 = arith.constant 0 : i32
    %c0_i32_0 = arith.constant 0 : i32
    return %arg0, %c0_i32 : i32, i32
  }
  func.func @transform_3(%arg0: i32) -> (i32, i32) {
    %c0_i32 = arith.constant 0 : i32
    %c0_i32_0 = arith.constant 0 : i32
    return %arg0, %c0_i32 : i32, i32
  }
}

</mosaic_0001>

<llo_original>
// kernel: linear_forward.1
$region0: #{linear_forward.1}
  #allocation0 [shape = 'u32[]', space=smem, size = 0x4, offset = 0x4, fixed_abs, tag = 'smem constant byte address 0x4 - core index']
  #allocation1 [shape = 'u32[144,128]{1,0:T(1,128)}', space=vmem, size = 0x12000, scoped, tag = 'internal scratch']
  #allocation2 [shape = 'f32[1]{0:T(128)S(6)}', space=smem, size = 0x200, scoped, tag = 'scoped memory for linear_forward.1']
  #allocation3 [shape = 'f32[1]{0:T(128)S(6)}', space=smem, size = 0x200, scoped, tag = 'scoped memory for linear_forward.1']
  %s0 = inlined_call_operand.<no memory space> [shape: f32[1], index: 0, kind: input, shape index: {}]
  %s1 = inlined_call_operand.<no memory space> [shape: f32[1], index: 1, kind: input, shape index: {}]
  %s2 = inlined_call_operand.vmem [shape: f32[8,128], index: 2, kind: input, shape index: {}]
  %s3 = inlined_call_operand.vmem [shape: f32[8,128], index: 3, kind: output, shape index: {}]
  %s4 = sld [smem:[#allocation0]]
  $region22: #{linear_forward.1} parent=0
    _
  %s6 = ssub.s32 1, %s4
  %s7 = scalar_select 0, %s6, %s4
  %8 = sst [smem:[#allocation2]] %s0
  %9 = sst [smem:[#allocation3]] %s1
  // Predicated region
  $region2: #{linear_forward.1} parent=0 // pred_check
    _
  $region3: #{linear_forward.1} parent=0 // pred_check_branch
    %11 = sbr.rel (0) target = $region5
  $region4: #{linear_forward.1} parent=0 // pred_region
    _
  $region5: #{linear_forward.1} parent=0 // pred_fallthru
    _
  // Predicated region
  $region6: #{linear_forward.1} parent=0 // pred_check
    _
  $region7: #{linear_forward.1} parent=0 // pred_check_branch
    %13 = sbr.rel (0) target = $region9
  $region8: #{linear_forward.1} parent=0 // pred_region
    _
  $region9: #{linear_forward.1} parent=0 // pred_fallthru
    _
  // Predicated region
  $region10: #{linear_forward.1} parent=0 // pred_check
    _
  $region11: #{linear_forward.1} parent=0 // pred_check_branch
    %15 = sbr.rel (0) target = $region13
  $region12: #{linear_forward.1} parent=0 // pred_region
    _
  $region13: #{linear_forward.1} parent=0 // pred_fallthru
    _
  %v16 = vld [vmem:[%s2] sm:$0xff]
  %s17 = sld [smem:[#allocation2]]
  %v18 = vstv %s17
  %v19 = vmul.f32 %v16, %v18
  %s20 = sld [smem:[#allocation3]]
  %v21 = vstv %s20
  %v22 = vadd.f32 %v19, %v21
  %23 = vst [vmem:[%s3] sm:$0xff] %v22
  // Predicated region
  $region14: #{linear_forward.1} parent=0 // pred_check
    _
  $region15: #{linear_forward.1} parent=0 // pred_check_branch
    %25 = sbr.rel (0) target = $region17
  $region16: #{linear_forward.1} parent=0 // pred_region
    _
  $region17: #{linear_forward.1} parent=0 // pred_fallthru
    _
  // Predicated region
  $region18: #{linear_forward.1} parent=0 // pred_check
    _
  $region19: #{linear_forward.1} parent=0 // pred_check_branch
    %27 = sbr.rel (0) target = $region21
  $region20: #{linear_forward.1} parent=0 // pred_region
    _
  $region21: #{linear_forward.1} parent=0 // pred_fallthru
    _

</llo_original>
